<compile_context>
chip_gen: v7x
topology: tpu7x:2x2x1
jax: 0.10.0
libtpu: 0.0.40
codegen_flags: <defaults>
</compile_context>

<pallas_src>
import functools

import jax
import jax.numpy as jnp
from jax.experimental import pallas as pl
from jax.experimental.pallas import tpu as pltpu

_NEG = -1e30  # finite "-inf": exp underflows to exactly 0, never produces NaN


def _round_up(x, m):
    return (x + m - 1) // m * m


def _vmem_ceiling_bytes():
    """Usable-VMEM ceiling per generation (v7x: 64 MiB, v5e/v6e: 128 MiB)."""
    cap = 64 * 1024 * 1024
    try:
        info = pltpu.get_tpu_info()
        cap = int(getattr(info, "vmem_capacity_bytes", cap)) or cap
    except Exception:
        pass
    return (cap * 3) // 4  # leave headroom for Mosaic-internal scratch


# --------------------------------------------------------------------------
# Path A: full class dimension resident per step (common case).
# --------------------------------------------------------------------------
def _kl_tile_kernel(ys_ref, yt_ref, o_ref, *, inv_t, n_rows, tn):
    ys = ys_ref[...].astype(jnp.float32) * inv_t
    yt = yt_ref[...].astype(jnp.float32) * inv_t

    ys_sh = ys - jnp.max(ys, axis=-1, keepdims=True)
    yt_sh = yt - jnp.max(yt, axis=-1, keepdims=True)

    e_t = jnp.exp(yt_sh)                                      # [TN, C]
    z_t = jnp.sum(e_t, axis=-1, keepdims=True)                # [TN, 1]
    z_s = jnp.sum(jnp.exp(ys_sh), axis=-1, keepdims=True)     # [TN, 1]
    num = jnp.sum(e_t * (yt_sh - ys_sh), axis=-1, keepdims=True)
    # TODO(synk): on v7x, if a profile shows the 2 XLUs binding, offload these
    # three lane sums to the idle MXU via jnp.dot(x, ones((C,128))).

    kl_rows = num * pl.reciprocal(z_t, approx=False) + (jnp.log(z_s) - jnp.log(z_t))

    # Mask ragged-last-tile rows in-kernel (no jnp.pad HBM round trip).
    row_ids = pl.program_id(0) * tn + jax.lax.broadcasted_iota(jnp.int32, (tn, 1), 0)
    kl_rows = jnp.where(row_ids < n_rows, kl_rows, 0.0)

    # Lane-dense per-tile partial (unmasked full-block store).
    o_ref[...] = jnp.broadcast_to(jnp.sum(kl_rows), o_ref.shape)


# --------------------------------------------------------------------------
# Path B: class-tiled online softmax (vocab-scale C, fits v7x's 64 MiB VMEM).
# --------------------------------------------------------------------------
def _kl_online_kernel(ys_ref, yt_ref, o_ref, m_t, m_s, z_t, z_s, a_acc,
                      *, inv_t, n_rows, n_cols, tn, tc):
    i = pl.program_id(0)
    j = pl.program_id(1)

    @pl.when(j == 0)
    def _():
        m_t[...] = jnp.full(m_t.shape, _NEG, jnp.float32)
        m_s[...] = jnp.full(m_s.shape, _NEG, jnp.float32)
        z_t[...] = jnp.zeros(z_t.shape, jnp.float32)
        z_s[...] = jnp.zeros(z_s.shape, jnp.float32)
        a_acc[...] = jnp.zeros(a_acc.shape, jnp.float32)

    ys = ys_ref[...].astype(jnp.float32) * inv_t
    yt = yt_ref[...].astype(jnp.float32) * inv_t
    if n_cols % tc != 0:  # ragged last class tile -> mask invalid columns
        col_ids = j * tc + jax.lax.broadcasted_iota(jnp.int32, (1, tc), 1)
        col_ok = col_ids < n_cols
        ys = jnp.where(col_ok, ys, _NEG)
        yt = jnp.where(col_ok, yt, _NEG)

    m_t_new = jnp.maximum(m_t[...], jnp.max(yt, axis=-1, keepdims=True))
    m_s_new = jnp.maximum(m_s[...], jnp.max(ys, axis=-1, keepdims=True))
    e_t = jnp.exp(yt - m_t_new)
    e_s = jnp.exp(ys - m_s_new)
    alpha_t = jnp.exp(m_t[...] - m_t_new)
    alpha_s = jnp.exp(m_s[...] - m_s_new)
    z_t[...] = alpha_t * z_t[...] + jnp.sum(e_t, axis=-1, keepdims=True)
    z_s[...] = alpha_s * z_s[...] + jnp.sum(e_s, axis=-1, keepdims=True)
    a_acc[...] = alpha_t * a_acc[...] + jnp.sum(e_t * (yt - ys), axis=-1, keepdims=True)
    m_t[...] = m_t_new
    m_s[...] = m_s_new

    @pl.when(j == pl.num_programs(1) - 1)
    def _():
        kl_rows = (a_acc[...] * pl.reciprocal(z_t[...], approx=False)
                   + (m_s[...] - m_t[...])
                   + (jnp.log(z_s[...]) - jnp.log(z_t[...])))
        row_ids = i * tn + jax.lax.broadcasted_iota(jnp.int32, (tn, 1), 0)
        kl_rows = jnp.where(row_ids < n_rows, kl_rows, 0.0)
        o_ref[...] = jnp.broadcast_to(jnp.sum(kl_rows), o_ref.shape)


def distill_kl(y_s: jax.Array, y_t: jax.Array, T: float, *,
               tile_rows=None, class_tile=None) -> jax.Array:
    """KL distillation loss matching DistillKL.forward(y_s, y_t).

    Pass logits in their NATIVE dtype (e.g. bf16): the kernel is HBM-bound,
    so upcasting in the wrapper would double traffic; softmax math is done in
    f32 inside VMEM regardless of the input dtype.
    """
    assert y_s.shape == y_t.shape and y_s.ndim == 2
    assert (jnp.issubdtype(y_s.dtype, jnp.floating)
            and jnp.issubdtype(y_t.dtype, jnp.floating)), (
        "float logits only (int8/fp8 would require 32-row sublane tiles)")
    N, C = y_s.shape
    inv_t = 1.0 / float(T)
    in_bytes = max(jnp.dtype(y_s.dtype).itemsize, jnp.dtype(y_t.dtype).itemsize)
    ceiling = _vmem_ceiling_bytes()

    def footprint(rows, cols):
        io = 2 * 2 * rows * cols * in_bytes   # 2 inputs x double-buffered blocks
        work = 4 * rows * cols * 4            # f32 working set inside the kernel
        return io + work + (2 << 20)          # slack

    n_rounded = _round_up(N, 16)

    # Row-tile size: ~2 MiB per input block keeps DMA near the HBM roofline.
    if tile_rows is None:
        tn = (2 * 1024 * 1024) // max(1, C * in_bytes)
        tn = max(16, min(4096, (tn // 16) * 16))
    else:
        tn = max(16, _round_up(int(tile_rows), 16))
    tn = min(tn, n_rounded)

    use_class_tiling = (class_tile is not None) or (footprint(16, C) > ceiling)

    if not use_class_tiling:
        # Shrink tn (never under-declare the limit) if the footprint is too big.
        while tn > 16 and footprint(tn, C) > ceiling:
            tn = max(16, ((tn // 2) // 16) * 16)
        num_tiles = (N + tn - 1) // tn
        vmem_limit = int(min(ceiling, max(footprint(tn, C), 32 * 1024 * 1024)))
        kernel = functools.partial(_kl_tile_kernel, inv_t=inv_t, n_rows=N, tn=tn)
        # TODO(synk): if a v6e profile shows exposed DMA, add
        # pipeline_mode=pl.Buffered(3) to both input BlockSpecs.
        partials = pl.pallas_call(
            kernel,
            out_shape=jax.ShapeDtypeStruct((num_tiles, 8, 128), jnp.float32),
            grid=(num_tiles,),
            in_specs=[
                pl.BlockSpec((tn, C), lambda i: (i, 0)),
                pl.BlockSpec((tn, C), lambda i: (i, 0)),
            ],
            out_specs=pl.BlockSpec((1, 8, 128), lambda i: (i, 0, 0)),
            compiler_params=pltpu.CompilerParams(
                # TODO(synk): evaluate pltpu.CORE_PARALLEL on v7x (2 TCs/chip).
                dimension_semantics=("parallel",),
                vmem_limit_bytes=vmem_limit,
            ),
        )(y_s, y_t)
    else:
        # Class-tiled online-softmax path (vocab-scale C, or forced for tests).
        if tile_rows is None:
            tn = min(tn, 256)  # keep per-row scratch tiny; rows stay cheap here
        if class_tile is not None:
            tc = int(class_tile)
            assert tc == C or tc % 128 == 0, "class_tile must be C or a multiple of 128"
        else:
            tc = 128
            while tc * 2 <= _round_up(C, 128) and footprint(tn, tc * 2) <= ceiling:
                tc *= 2
        tc = min(tc, _round_up(C, 128))
        while tn > 16 and footprint(tn, tc) > ceiling:
            tn = max(16, ((tn // 2) // 16) * 16)

        num_row_tiles = (N + tn - 1) // tn
        num_class_tiles = (C + tc - 1) // tc
        scratch_bytes = 5 * (tn // 8 + 1) * 8 * 128 * 4  # (tn,1) f32 lane-padded
        vmem_limit = int(min(ceiling, max(footprint(tn, tc) + scratch_bytes,
                                          32 * 1024 * 1024)))
        kernel = functools.partial(_kl_online_kernel, inv_t=inv_t,
                                   n_rows=N, n_cols=C, tn=tn, tc=tc)
        partials = pl.pallas_call(
            kernel,
            out_shape=jax.ShapeDtypeStruct((num_row_tiles, 8, 128), jnp.float32),
            grid=(num_row_tiles, num_class_tiles),
            in_specs=[
                pl.BlockSpec((tn, tc), lambda i, j: (i, j)),
                pl.BlockSpec((tn, tc), lambda i, j: (i, j)),
            ],
            out_specs=pl.BlockSpec((1, 8, 128), lambda i, j: (i, 0, 0)),
            scratch_shapes=[pltpu.VMEM((tn, 1), jnp.float32) for _ in range(5)],
            compiler_params=pltpu.CompilerParams(
                dimension_semantics=("parallel", "arbitrary"),
                vmem_limit_bytes=vmem_limit,
            ),
        )(y_s, y_t)

    # Tiny epilogue in JAX: sum per-tile partials, apply T^2 / N.
    return jnp.sum(partials[:, 0, 0]) * (float(T) * float(T)) / N


def _reference(y_s, y_t, T):
    # Pure-JAX reference (matches F.kl_div(..., size_average=False) semantics).
    log_p_s = jax.nn.log_softmax(y_s / T, axis=1)
    p_t = jax.nn.softmax(y_t / T, axis=1)
    log_p_t = jax.nn.log_softmax(y_t / T, axis=1)
    return jnp.sum(p_t * (log_p_t - log_p_s)) * T * T / y_s.shape[0]


if __name__ == "__main__":
    T = 4.0  # temperature from DistillKL.__init__
    key = jax.random.PRNGKey(0)
    k1, k2, k3, k4, k5, k6 = jax.random.split(key, 6)

    # Case 1: single (ragged) tile, f32, batch=8, classes=128.
    y_s1 = jax.random.normal(k1, (8, 128), dtype=jnp.float32)
    y_t1 = jax.random.normal(k2, (8, 128), dtype=jnp.float32)
    loss1 = jax.block_until_ready(distill_kl(y_s1, y_t1, T))
    ref1 = jax.block_until_ready(_reference(y_s1, y_t1, T))
    assert jnp.allclose(loss1, ref1, rtol=1e-4, atol=1e-5), (loss1, ref1)

    # Case 2: multi-tile row grid with ragged last tile (40 rows, tn=16),
    # bf16 logits kept in native dtype through the pallas_call boundary.
    y_s2 = jax.random.normal(k3, (40, 128), dtype=jnp.bfloat16)
    y_t2 = jax.random.normal(k4, (40, 128), dtype=jnp.bfloat16)
    loss2 = jax.block_until_ready(distill_kl(y_s2, y_t2, T, tile_rows=16))
    ref2 = jax.block_until_ready(
        _reference(y_s2.astype(jnp.float32), y_t2.astype(jnp.float32), T))
    assert jnp.allclose(loss2, ref2, rtol=1e-4, atol=1e-5), (loss2, ref2)

    # Case 3: force the class-tiled online-softmax path (ragged rows AND cols).
    y_s3 = jax.random.normal(k5, (24, 320), dtype=jnp.float32)
    y_t3 = jax.random.normal(k6, (24, 320), dtype=jnp.float32)
    loss3 = jax.block_until_ready(
        distill_kl(y_s3, y_t3, T, tile_rows=16, class_tile=128))
    ref3 = jax.block_until_ready(_reference(y_s3, y_t3, T))
    assert jnp.allclose(loss3, ref3, rtol=1e-4, atol=1e-5), (loss3, ref3)

    print("KERNEL_OK")
</pallas_src>

<mosaic_0001>
module attributes {stable_mosaic.version = 11 : i64} {
  func.func @_kl_tile_kernel(%arg0: i32, %arg1: memref<16x128xf32, #tpu.memory_space<vmem>>, %arg2: memref<16x128xf32, #tpu.memory_space<vmem>>, %arg3: memref<1x8x128xf32, #tpu.memory_space<vmem>>) attributes {dimension_semantics = [#tpu.dimension_semantics<parallel>], iteration_bounds = array<i64: 1>, scalar_prefetch = 0 : i64, scratch_operands = 0 : i64, tpu.core_type = #tpu.core_type<tc>, window_params = [{transform_indices = @transform_0, window_bounds = array<i64: 16, 128>}, {transform_indices = @transform_1, window_bounds = array<i64: 16, 128>}, {transform_indices = @transform_2, window_bounds = array<i64: 1, 8, 128>}]} {
    %c0 = arith.constant 0 : index
    %c0_0 = arith.constant 0 : index
    %0 = vector.load %arg1[%c0, %c0_0] : memref<16x128xf32, #tpu.memory_space<vmem>>, vector<16x128xf32>
    %cst = arith.constant 2.500000e-01 : f32
    %1 = vector.broadcast %cst : f32 to vector<16x128xf32>
    %2 = arith.mulf %0, %1 : vector<16x128xf32>
    %c0_1 = arith.constant 0 : index
    %c0_2 = arith.constant 0 : index
    %3 = vector.load %arg2[%c0_1, %c0_2] : memref<16x128xf32, #tpu.memory_space<vmem>>, vector<16x128xf32>
    %cst_3 = arith.constant 2.500000e-01 : f32
    %4 = vector.broadcast %cst_3 : f32 to vector<16x128xf32>
    %5 = arith.mulf %3, %4 : vector<16x128xf32>
    %cst_4 = arith.constant dense<0xFF800000> : vector<16xf32>
    %6 = vector.multi_reduction <maximumf>, %2, %cst_4 [1] : vector<16x128xf32> to vector<16xf32>
    %7 = vector.shape_cast %6 : vector<16xf32> to vector<16x1xf32>
    %8 = vector.broadcast %7 : vector<16x1xf32> to vector<16x128xf32>
    %9 = arith.subf %2, %8 : vector<16x128xf32>
    %cst_5 = arith.constant dense<0xFF800000> : vector<16xf32>
    %10 = vector.multi_reduction <maximumf>, %5, %cst_5 [1] : vector<16x128xf32> to vector<16xf32>
    %11 = vector.shape_cast %10 : vector<16xf32> to vector<16x1xf32>
    %12 = vector.broadcast %11 : vector<16x1xf32> to vector<16x128xf32>
    %13 = arith.subf %5, %12 : vector<16x128xf32>
    %14 = math.exp %13 : vector<16x128xf32>
    %cst_6 = arith.constant dense<0.000000e+00> : vector<16xf32>
    %15 = vector.multi_reduction <add>, %14, %cst_6 [1] : vector<16x128xf32> to vector<16xf32>
    %16 = vector.shape_cast %15 : vector<16xf32> to vector<16x1xf32>
    %17 = math.exp %9 : vector<16x128xf32>
    %cst_7 = arith.constant dense<0.000000e+00> : vector<16xf32>
    %18 = vector.multi_reduction <add>, %17, %cst_7 [1] : vector<16x128xf32> to vector<16xf32>
    %19 = vector.shape_cast %18 : vector<16xf32> to vector<16x1xf32>
    %20 = arith.subf %13, %9 : vector<16x128xf32>
    %21 = arith.mulf %14, %20 : vector<16x128xf32>
    %cst_8 = arith.constant dense<0.000000e+00> : vector<16xf32>
    %22 = vector.multi_reduction <add>, %21, %cst_8 [1] : vector<16x128xf32> to vector<16xf32>
    %23 = vector.shape_cast %22 : vector<16xf32> to vector<16x1xf32>
    %24 = tpu.reciprocal %16 : vector<16x1xf32> -> vector<16x1xf32>
    %25 = arith.mulf %23, %24 : vector<16x1xf32>
    %26 = math.log %19 : vector<16x1xf32>
    %27 = math.log %16 : vector<16x1xf32>
    %28 = arith.subf %26, %27 : vector<16x1xf32>
    %29 = arith.addf %25, %28 : vector<16x1xf32>
    %c16_i32 = arith.constant 16 : i32
    %30 = arith.muli %arg0, %c16_i32 : i32
    %31 = tpu.iota {dimensions = array<i32: 0>} : vector<16x1xi32>
    %32 = vector.broadcast %30 : i32 to vector<16x1xi32>
    %33 = arith.addi %32, %31 : vector<16x1xi32>
    %c8_i32 = arith.constant 8 : i32
    %34 = vector.broadcast %c8_i32 : i32 to vector<16x1xi32>
    %35 = arith.cmpi slt, %33, %34 : vector<16x1xi32>
    %cst_9 = arith.constant 0.000000e+00 : f32
    %36 = vector.broadcast %cst_9 : f32 to vector<16x1xf32>
    %37 = arith.select %35, %29, %36 : vector<16x1xi1>, vector<16x1xf32>
    %38 = vector.shape_cast %37 : vector<16x1xf32> to vector<1x16x1xf32>
    %cst_10 = arith.constant dense<0.000000e+00> : vector<1xf32>
    %39 = vector.multi_reduction <add>, %38, %cst_10 [1, 2] : vector<1x16x1xf32> to vector<1xf32>
    %40 = vector.shape_cast %39 : vector<1xf32> to vector<1x1x1xf32>
    %41 = vector.extract %40[0, 0, 0] : f32 from vector<1x1x1xf32>
    %42 = vector.broadcast %41 : f32 to vector<1x8x128xf32>
    %c0_11 = arith.constant 0 : index
    %c0_12 = arith.constant 0 : index
    %c0_13 = arith.constant 0 : index
    %43 = vector.load %arg3[%c0_11, %c0_12, %c0_13] : memref<1x8x128xf32, #tpu.memory_space<vmem>>, vector<1x8x128xf32>
    tpu.vector_store %arg3[%c0_11, %c0_12, %c0_13], %42 {strides = array<i32>} : memref<1x8x128xf32, #tpu.memory_space<vmem>>, vector<1x8x128xf32>,
    return
  }
  func.func @transform_0(%arg0: i32) -> (i32, i32) {
    %c0_i32 = arith.constant 0 : i32
    %c0_i32_0 = arith.constant 0 : i32
    return %arg0, %c0_i32 : i32, i32
  }
  func.func @transform_1(%arg0: i32) -> (i32, i32) {
    %c0_i32 = arith.constant 0 : i32
    %c0_i32_0 = arith.constant 0 : i32
    return %arg0, %c0_i32 : i32, i32
  }
  func.func @transform_2(%arg0: i32) -> (i32, i32, i32) {
    %c0_i32 = arith.constant 0 : i32
    %c0_i32_0 = arith.constant 0 : i32
    %c0_i32_1 = arith.constant 0 : i32
    return %arg0, %c0_i32, %c0_i32_0 : i32, i32, i32
  }
}

</mosaic_0001>

<llo_original>
// kernel: tpu_custom_call.1
$region0: #{tpu_custom_call.1}
  #allocation0 [shape = 'u32[]', space=smem, size = 0x4, offset = 0x4, fixed_abs, tag = 'smem constant byte address 0x4 - core index']
  #allocation1 [shape = 'u32[144,128]{1,0:T(1,128)}', space=vmem, size = 0x12000, scoped, tag = 'internal scratch']
  %s0 = inlined_call_operand.hbm [shape: f32[8,128], index: 0, kind: input, shape index: {}]
  %s1 = inlined_call_operand.hbm [shape: f32[8,128], index: 1, kind: input, shape index: {}]
  %s2 = inlined_call_operand.hbm [shape: f32[1,8,128], index: 2, kind: output, shape index: {}]
  %s3 = sld [smem:[#allocation0]]
  $region26: #{tpu_custom_call.1} parent=0
    _
  %s5 = ssub.s32 1, %s3
  %s6 = scalar_select 0, %s5, %s3
  $region1: #{tpu_custom_call.1} parent=0
    #allocation2 [shape = 'u8[8192]{0}', space=vmem, size = 0x2000, scoped, tag = 'input window, operand 0, single buffered']
    #allocation3 [shape = 's32[1]{0}', space=sflag, size = 0x4, scoped, tag = 'scoped memory for tpu_custom_call.1']
    #allocation4 [shape = 's32[1]{0}', space=sflag, size = 0x4, scoped, tag = 'scoped memory for tpu_custom_call.1']
    #allocation5 [shape = 'u8[8192]{0}', space=vmem, size = 0x2000, scoped, tag = 'input window, operand 1, single buffered']
    #allocation6 [shape = 's32[1]{0}', space=sflag, size = 0x4, scoped, tag = 'scoped memory for tpu_custom_call.1']
    #allocation7 [shape = 'u8[4096]{0}', space=vmem, size = 0x1000, scoped, tag = 'output window, operand 0, single buffered']
    %7 = vsyncpa [#allocation3], 0
    %8 = vsyncpa [#allocation6], 0
    %9 = vsyncpa [#allocation4], 0
    // Predicated region
    $region2: #{tpu_custom_call.1} parent=1 // pred_check
      _
    $region3: #{tpu_custom_call.1} parent=1 // pred_check_branch
      %11 = sbr.rel (0) target = $region5
    $region4: #{tpu_custom_call.1} parent=1 // pred_region
      %s13 = ssub.s32 256, 128
      %14 = vsyncadd [#allocation3], %s13
      %s15 = sshll.u32 [#allocation2], 4
      %s16 = int_to_ptr.vmem [resolvable:$true] %s15
      %21 = dma.hbm_to_vmem [thread:$0]  %s0, 128, %s16, [#allocation3], 128, 128, 8
    $region5: #{tpu_custom_call.1} parent=1 // pred_fallthru
      _
    // Predicated region
    $region6: #{tpu_custom_call.1} parent=1 // pred_check
      _
    $region7: #{tpu_custom_call.1} parent=1 // pred_check_branch
      %23 = sbr.rel (0) target = $region9
    $region8: #{tpu_custom_call.1} parent=1 // pred_region
      %s25 = ssub.s32 256, 128
      %26 = vsyncadd [#allocation6], %s25
      %s27 = sshll.u32 [#allocation5], 4
      %s28 = int_to_ptr.vmem [resolvable:$true] %s27
      %33 = dma.hbm_to_vmem [thread:$0]  %s1, 128, %s28, [#allocation6], 128, 128, 8
    $region9: #{tpu_custom_call.1} parent=1 // pred_fallthru
      _
    // Predicated region
    $region10: #{tpu_custom_call.1} parent=1 // pred_check
      _
    $region11: #{tpu_custom_call.1} parent=1 // pred_check_branch
      %35 = sbr.rel (0) target = $region13
    $region12: #{tpu_custom_call.1} parent=1 // pred_region
      %36 = dma.done [#allocation3], 256
    $region13: #{tpu_custom_call.1} parent=1 // pred_fallthru
      _
    // Predicated region
    $region14: #{tpu_custom_call.1} parent=1 // pred_check
      _
    $region15: #{tpu_custom_call.1} parent=1 // pred_check_branch
      %38 = sbr.rel (0) target = $region17
    $region16: #{tpu_custom_call.1} parent=1 // pred_region
      %39 = dma.done [#allocation6], 256
    $region17: #{tpu_custom_call.1} parent=1 // pred_fallthru
      _
    %v40 = vld [vmem:[#allocation2] sm:$0xff]
    %v41 = vld [vmem:[#allocation2 + $0x8] sm:$0xff]
    %v42 = vmul.f32 %v40, 0.25
    %v43 = vmul.f32 %v41, 0.25
    %v44 = vld [vmem:[#allocation5] sm:$0xff]
    %v45 = vld [vmem:[#allocation5 + $0x8] sm:$0xff]
    %v46 = vmul.f32 %v44, 0.25
    %v47 = vmul.f32 %v45, 0.25
    %48 = vmax.xlane.f32.xlu0 %v42
    %v49 = vpop.xlane.xlu0 %48
    %50 = vmax.xlane.f32.xlu0 %v43
    %v51 = vpop.xlane.xlu0 %50
    %v52 = vsub.f32 %v42, %v49
    %v53 = vsub.f32 %v43, %v51
    %54 = vmax.xlane.f32.xlu0 %v46
    %v55 = vpop.xlane.xlu0 %54
    %56 = vmax.xlane.f32.xlu0 %v47
    %v57 = vpop.xlane.xlu0 %56
    %v58 = vsub.f32 %v46, %v55
    %v59 = vsub.f32 %v47, %v57
    %v60 = vmul.f32 %v58, 1.442695
    %v61 = vpow.pop %v60
    %v62 = vmul.f32 %v59, 1.442695
    %v63 = vpow.pop %v62
    %64 = vadd.xlane.f32.xlu0 %v61
    %v65 = vpop.xlane.xlu0 %64
    %66 = vadd.xlane.f32.xlu0 %v63
    %v67 = vpop.xlane.xlu0 %66
    %v68 = vmul.f32 %v52, 1.442695
    %v69 = vpow.pop %v68
    %v70 = vmul.f32 %v53, 1.442695
    %v71 = vpow.pop %v70
    %72 = vadd.xlane.f32.xlu0 %v69
    %v73 = vpop.xlane.xlu0 %72
    %74 = vadd.xlane.f32.xlu0 %v71
    %v75 = vpop.xlane.xlu0 %74
    %v76 = vsub.f32 %v58, %v52
    %v77 = vsub.f32 %v59, %v53
    %v78 = vmul.f32 %v61, %v76
    %v79 = vmul.f32 %v63, %v77
    %80 = vadd.xlane.f32.xlu0 %v78
    %v81 = vpop.xlane.xlu0 %80
    %82 = vadd.xlane.f32.xlu0 %v79
    %v83 = vpop.xlane.xlu0 %82
    %v84 = vrcp.pop %v65
    %v85 = vrcp.pop %v67
    %v86 = vmul.f32 %v81, %v84
    %v87 = vmul.f32 %v83, %v85
    %v88 = vlog2.pop %v73
    %v89 = vmul.f32 %v88, 0.6931472
    %v90 = vlog2.pop %v75
    %v91 = vmul.f32 %v90, 0.6931472
    %v92 = vlog2.pop %v65
    %v93 = vmul.f32 %v92, 0.6931472
    %v94 = vlog2.pop %v67
    %v95 = vmul.f32 %v94, 0.6931472
    %v96 = vsub.f32 %v89, %v93
    %v97 = vsub.f32 %v91, %v95
    %v98 = vadd.f32 %v86, %v96
    %v99 = vadd.f32 %v87, %v97
    %s100 = smul.u32 0, 16
    %v101 = vlaneseq
    %v102 = vshrl.u32 %v101, 7
    %v103 = vadd.s32 %v102, 8
    %v104 = vstv %s100
    %v105 = vadd.s32 %v104, %v102
    %v106 = vadd.s32 %v104, %v103
    %vm107 = vcmp.lt.s32.totalorder %v105, 8
    %vm108 = vcmp.lt.s32.totalorder %v106, 8
    %v109 = vsel %vm107, %v98, 0.0
    %v110 = vsel %vm108, %v99, 0.0
    %vm111 = vcmask 7168
    %v112 = vsel %vm111, %v109, 0.0
    %v113 = vsel %vm111, %v110, 0.0
    %v114 = vadd.f32 %v112, %v113
    %115 = vadd.xlane.f32.xlu0 %v114
    %v116 = vpop.xlane.xlu0 %115
    %v117 = vrot.slane %v116, 4
    %v118 = vadd.f32 %v116, %v117
    %v119 = vrot.slane %v118, 2
    %v120 = vadd.f32 %v118, %v119
    %v121 = vrot.slane %v120, 1
    %v122 = vadd.f32 %v120, %v121
    %s123 = vtos %v122
    %v124 = vstv %s123
    %125 = vst [vmem:[#allocation7] sm:$0xff] %v124
    // Predicated region
    $region18: #{tpu_custom_call.1} parent=1 // pred_check
      _
    $region19: #{tpu_custom_call.1} parent=1 // pred_check_branch
      %127 = sbr.rel (0) target = $region21
    $region20: #{tpu_custom_call.1} parent=1 // pred_region
      %s129 = ssub.s32 128, 128
      %130 = vsyncadd [#allocation4], %s129
      %s132 = sshll.u32 [#allocation7], 4
      %s133 = int_to_ptr.vmem [resolvable:$true] %s132
      %135 = dma.vmem_to_hbm [thread:$0]  %s133, 128, %s2, [#allocation4]
    $region21: #{tpu_custom_call.1} parent=1 // pred_fallthru
      _
    // Predicated region
    $region22: #{tpu_custom_call.1} parent=1 // pred_check
      _
    $region23: #{tpu_custom_call.1} parent=1 // pred_check_branch
      %137 = sbr.rel (0) target = $region25
    $region24: #{tpu_custom_call.1} parent=1 // pred_region
      %138 = dma.done [#allocation4], 128
    $region25: #{tpu_custom_call.1} parent=1 // pred_fallthru
      _
    %139 = vsyncpa [#allocation3], 1
    %140 = vsyncpa [#allocation6], 1
    %141 = vsyncpa [#allocation4], 1

</llo_original>
